<compile_context>
chip_gen: v5e
topology: v5e:2x2
jax: 0.10.0
libtpu: 0.0.40
codegen_flags: <defaults>
</compile_context>

<pallas_src>
import numpy as np
import jax
import jax.numpy as jnp
from jax.experimental import pallas as pl
from jax.experimental.pallas import tpu as pltpu

_HARD_VMEM_CAP = 48 * 1024 * 1024   # never assume more (v7x: 64 MiB physical per TC)
_MIN_VMEM_LIMIT = 16 * 1024 * 1024


def make_sinusoid_table(n_position: int, model_d: int, dtype=jnp.float32) -> jnp.ndarray:
    """Exact re-implementation of _get_sinusoid_encoding_table, built once at
    init in the model dtype (hoists the per-call slice/cast off the hot path)."""
    pos = np.arange(n_position, dtype=np.float64)[:, None]          # (P, 1)
    dim = np.arange(model_d, dtype=np.float64)[None, :]             # (1, D)
    angle = pos / np.power(10000.0, 2.0 * (dim // 2) / model_d)     # (P, D)
    table = np.empty((n_position, model_d), dtype=np.float64)
    table[:, 0::2] = np.sin(angle[:, 0::2])
    table[:, 1::2] = np.cos(angle[:, 1::2])
    return jnp.asarray(table, dtype=dtype)                          # (P, D)


def _pos_enc_kernel(x_ref, pos_ref, o_ref):
    # Plain 2D elementwise add; pos broadcasts over sublanes when its block
    # has a single row (K == 1 path), else the blocks match exactly.
    o_ref[...] = x_ref[...] + pos_ref[...]


def _sublane(dtype) -> int:
    return {4: 8, 2: 16, 1: 32}.get(jnp.dtype(dtype).itemsize, 8)


def _vmem_limit_bytes() -> int:
    """Scoped-VMEM target: half of physical VMEM, capped so it is safe on every
    generation (v5e/v6e: 128 MiB physical, v7x: 64 MiB per TensorCore)."""
    try:
        phys = int(getattr(pltpu.get_tpu_info(), "vmem_capacity_bytes", 64 << 20))
    except Exception:
        phys = 64 << 20  # assume the smallest generation if the query fails
    return max(_MIN_VMEM_LIMIT, min(phys // 2, _HARD_VMEM_CAP))


def _pick_chunking(batch: int, n: int, sublane: int):
    """View x as (batch*K, L) with L = n // K a multiple of 128.

    K > 1 only when batch alone underfills the sublanes (batch < sublane); then
    K is a multiple of the sublane count, so a sublane-sized row tile always
    maps onto a whole pos row-block."""
    if n % 128 != 0 or batch >= sublane:
        return 1, n
    m = n // 128
    k = sublane
    while k <= m:
        if m % k == 0:
            return k, n // k
        k += sublane
    return 1, n


def _pick_row_tile(rows: int, sublane: int) -> int:
    """Smallest sublane-aligned row tile dividing rows (columns are maximized first)."""
    if rows % sublane == 0:
        return sublane
    start = min((rows // 8) * 8, 4 * sublane)
    for tr in range(start, 7, -8):
        if rows % tr == 0:
            return tr
    return rows  # full-extent block: exempt from the sublane rule


def _pick_col_tile(cols: int, row_tile: int, pos_rows: int, itemsize: int,
                   budget_bytes: int) -> int:
    """Largest multiple-of-128 column tile dividing cols whose resident working
    set (double-buffered x + out + pos blocks) fits budget_bytes."""
    if cols % 128 != 0:
        return cols  # full-extent fallback; caller guards VMEM
    per_col = 2 * (2 * row_tile + pos_rows) * itemsize
    max_t = max(1, budget_bytes // (per_col * 128))
    m = cols // 128
    if m <= max_t:
        return cols
    for t in range(min(max_t, m), 0, -1):
        if m % t == 0:
            return 128 * t
    return 128


def _grow_row_tile(tr: int, rows: int, k: int, tc: int, pos_tiled: bool,
                   itemsize: int, budget_bytes: int, max_rows: int) -> int:
    """With a full-width block (one contiguous HBM run) grow rows into the
    remaining VMEM headroom to amortize the ~0.35us per-grid-step overhead."""
    best, cand = tr, tr
    while True:
        cand += tr
        if cand > min(rows, max_rows):
            break
        if rows % cand != 0 or (pos_tiled and k % cand != 0):
            continue
        pos_rows = cand if pos_tiled else 1
        if 2 * (2 * cand + pos_rows) * tc * itemsize > budget_bytes:
            break
        best = cand
    return best


def positional_encoding(x: jnp.ndarray, pos_table: jnp.ndarray) -> jnp.ndarray:
    """x: (B, S, D); pos_table: (P, D), P >= S (ideally pre-sliced to S and in
    x.dtype at init). Returns x + pos_table[:S]."""
    B, S, D = x.shape
    N = S * D
    itemsize = jnp.dtype(x.dtype).itemsize
    sub = _sublane(x.dtype)

    # No-ops when the table was prepared at init (same S, same dtype).
    pos = pos_table
    if pos.shape[0] != S:
        pos = pos[:S]
    if pos.dtype != x.dtype:
        # TODO(synk): low-precision x adds in x.dtype; the torch ref adds an fp32 buffer.
        pos = pos.astype(x.dtype)

    # Sublane-dense, lane-dense 2D views (free reshapes of contiguous arrays).
    K, L = _pick_chunking(B, N, sub)
    R = B * K
    x2d = x.reshape(R, L)
    pos2d = pos.reshape(K, L)

    vmem_limit = _vmem_limit_bytes()
    budget = (vmem_limit * 3) // 4  # headroom for compiler scratch / semaphores

    pos_tiled = K > 1
    tr = sub if pos_tiled else _pick_row_tile(R, sub)
    pos_tr = tr if pos_tiled else 1
    tc = _pick_col_tile(L, tr, pos_tr, itemsize, budget)
    n_col = L // tc

    if tc == L:
        # Keep >= 2 blocks on a parallel axis for sizable inputs (v7x: 2 TCs).
        small = R * L * itemsize <= (1 << 20)
        max_rows = R if (pos_tiled or n_col > 1 or small) else max(tr, R // 2)
        tr = _grow_row_tile(tr, R, K, tc, pos_tiled, itemsize, budget, max_rows)
        pos_tr = tr if pos_tiled else 1

    # Full-extent fallback guard: make sure the working set actually fits.
    resident = 2 * (2 * tr + pos_tr) * tc * itemsize
    if resident > budget:
        vmem_limit = min(_HARD_VMEM_CAP, max(vmem_limit, (resident * 4) // 3))
        # TODO(synk): if `resident` still exceeds the v7x cap (huge odd-N model
        # dims), a masked column tiling would be required.

    if pos_tiled:
        nk = K // tr
        # pos block index is constant across the inner batch axis -> streamed once.
        grid = (nk, n_col, B)
        in_specs = [
            pl.BlockSpec((tr, tc), lambda kb, c, b: (b * nk + kb, c)),
            pl.BlockSpec((tr, tc), lambda kb, c, b: (kb, c)),
        ]
        out_spec = pl.BlockSpec((tr, tc), lambda kb, c, b: (b * nk + kb, c))
        semantics = ("parallel", "parallel", "parallel")
    else:
        n_row = R // tr
        # Column axis outer: the (1, tc) pos row is reused across the inner row axis.
        grid = (n_col, n_row)
        in_specs = [
            pl.BlockSpec((tr, tc), lambda c, r: (r, c)),
            pl.BlockSpec((1, tc), lambda c, r: (0, c)),
        ]
        out_spec = pl.BlockSpec((tr, tc), lambda c, r: (r, c))
        semantics = ("parallel", "parallel")

    out2d = pl.pallas_call(
        _pos_enc_kernel,
        out_shape=jax.ShapeDtypeStruct((R, L), x.dtype),
        grid=grid,
        in_specs=in_specs,
        out_specs=out_spec,
        compiler_params=pltpu.CompilerParams(
            dimension_semantics=semantics,
            vmem_limit_bytes=int(vmem_limit),
        ),
    )(x2d, pos2d)
    return out2d.reshape(B, S, D)


if __name__ == "__main__":
    key = jax.random.PRNGKey(0)

    # Config consistent with the module: batch=2, seq=8, hidden=32, n_position=16.
    B, S, D, P = 2, 8, 32, 16
    x = jax.random.normal(key, (B, S, D), dtype=jnp.float32)
    tbl = make_sinusoid_table(P, D, dtype=jnp.float32)

    out = jax.block_until_ready(positional_encoding(x, tbl))
    ref = x + tbl[None, :S, :]
    assert out.shape == (B, S, D)
    np.testing.assert_allclose(np.asarray(out), np.asarray(ref), rtol=1e-6, atol=1e-6)

    # Second config exercising the sublane-chunked (K > 1) 3D-grid path.
    B2, S2, D2, P2 = 2, 64, 128, 128
    x2 = jax.random.normal(jax.random.PRNGKey(0), (B2, S2, D2), dtype=jnp.float32)
    tbl2 = make_sinusoid_table(P2, D2, dtype=jnp.float32)
    out2 = jax.block_until_ready(positional_encoding(x2, tbl2))
    ref2 = x2 + tbl2[None, :S2, :]
    np.testing.assert_allclose(np.asarray(out2), np.asarray(ref2), rtol=1e-6, atol=1e-6)

    print("KERNEL_OK")
</pallas_src>

<mosaic_0001>
module attributes {stable_mosaic.version = 11 : i64} {
  func.func @_pos_enc_kernel(%arg0: i32, %arg1: i32, %arg2: memref<2x256xf32, #tpu.memory_space<vmem>>, %arg3: memref<1x256xf32, #tpu.memory_space<vmem>>, %arg4: memref<2x256xf32, #tpu.memory_space<vmem>>) attributes {dimension_semantics = [#tpu.dimension_semantics<parallel>, #tpu.dimension_semantics<parallel>], iteration_bounds = array<i64: 1, 1>, scalar_prefetch = 0 : i64, scratch_operands = 0 : i64, tpu.core_type = #tpu.core_type<tc>, window_params = [{transform_indices = @transform_0, window_bounds = array<i64: 2, 256>}, {transform_indices = @transform_1, window_bounds = array<i64: 1, 256>}, {transform_indices = @transform_2, window_bounds = array<i64: 2, 256>}]} {
    %c0 = arith.constant 0 : index
    %c0_0 = arith.constant 0 : index
    %0 = vector.load %arg2[%c0, %c0_0] : memref<2x256xf32, #tpu.memory_space<vmem>>, vector<2x256xf32>
    %c0_1 = arith.constant 0 : index
    %c0_2 = arith.constant 0 : index
    %1 = vector.load %arg3[%c0_1, %c0_2] : memref<1x256xf32, #tpu.memory_space<vmem>>, vector<1x256xf32>
    %2 = vector.broadcast %1 : vector<1x256xf32> to vector<2x256xf32>
    %3 = arith.addf %0, %2 : vector<2x256xf32>
    %c0_3 = arith.constant 0 : index
    %c0_4 = arith.constant 0 : index
    %4 = vector.load %arg4[%c0_3, %c0_4] : memref<2x256xf32, #tpu.memory_space<vmem>>, vector<2x256xf32>
    tpu.vector_store %arg4[%c0_3, %c0_4], %3 {strides = array<i32>} : memref<2x256xf32, #tpu.memory_space<vmem>>, vector<2x256xf32>,
    return
  }
  func.func @transform_0(%arg0: i32, %arg1: i32) -> (i32, i32) {
    %c0_i32 = arith.constant 0 : i32
    return %arg1, %arg0 : i32, i32
  }
  func.func @transform_1(%arg0: i32, %arg1: i32) -> (i32, i32) {
    %c0_i32 = arith.constant 0 : i32
    %c0_i32_0 = arith.constant 0 : i32
    return %c0_i32, %arg0 : i32, i32
  }
  func.func @transform_2(%arg0: i32, %arg1: i32) -> (i32, i32) {
    %c0_i32 = arith.constant 0 : i32
    return %arg1, %arg0 : i32, i32
  }
}

</mosaic_0001>

<llo_original>
// kernel: tpu_custom_call.1
$region0: #{tpu_custom_call.1}
  #allocation0 [shape = 'u32[]', space=smem, size = 0x4, offset = 0x4, fixed_abs, tag = 'smem constant byte address 0x4 - core index']
  #allocation1 [shape = 'u32[72,128]{1,0:T(1,128)}', space=vmem, size = 0x9000, scoped, tag = 'internal scratch']
  %s0 = inlined_call_operand.hbm [shape: f32[2,256], index: 0, kind: input, shape index: {}]
  %s1 = inlined_call_operand.hbm [shape: f32[1,256], index: 1, kind: input, shape index: {}]
  %s2 = inlined_call_operand.hbm [shape: f32[2,256], index: 2, kind: output, shape index: {}]
  %s3 = sld [smem:[#allocation0]]
  $region26: #{tpu_custom_call.1} parent=0
    _
  %s5 = ssub.s32 1, %s3
  %s6 = scalar_select 0, %s5, %s3
  $region1: #{tpu_custom_call.1} parent=0
    #allocation2 [shape = 'u8[2048]{0}', space=vmem, size = 0x800, scoped, tag = 'input window, operand 0, single buffered']
    #allocation3 [shape = 's32[1]{0}', space=sflag, size = 0x4, scoped, tag = 'scoped memory for tpu_custom_call.1']
    #allocation4 [shape = 's32[1]{0}', space=sflag, size = 0x4, scoped, tag = 'scoped memory for tpu_custom_call.1']
    #allocation5 [shape = 'u8[1024]{0}', space=vmem, size = 0x400, scoped, tag = 'input window, operand 1, single buffered']
    #allocation6 [shape = 's32[1]{0}', space=sflag, size = 0x4, scoped, tag = 'scoped memory for tpu_custom_call.1']
    #allocation7 [shape = 'u8[2048]{0}', space=vmem, size = 0x800, scoped, tag = 'output window, operand 0, single buffered']
    %7 = vsyncpa [#allocation3], 0
    %8 = vsyncpa [#allocation6], 0
    %9 = vsyncpa [#allocation4], 0
    // Predicated region
    $region2: #{tpu_custom_call.1} parent=1 // pred_check
      _
    $region3: #{tpu_custom_call.1} parent=1 // pred_check_branch
      %11 = sbr.rel (0) target = $region5
    $region4: #{tpu_custom_call.1} parent=1 // pred_region
      %13 = vsyncadd [#allocation3], 0
      %s15 = sshll.u32 %s0, 4
      %s16 = int_to_ptr.hbm [resolvable:$true] %s15
      %s17 = sshll.u32 [#allocation2], 4
      %s18 = int_to_ptr.vmem [resolvable:$true] %s17
      %20 = dma.hbm_to_vmem [thread:$0]  %s16, 64, %s18, [#allocation3]
    $region5: #{tpu_custom_call.1} parent=1 // pred_fallthru
      _
    // Predicated region
    $region6: #{tpu_custom_call.1} parent=1 // pred_check
      _
    $region7: #{tpu_custom_call.1} parent=1 // pred_check_branch
      %22 = sbr.rel (0) target = $region9
    $region8: #{tpu_custom_call.1} parent=1 // pred_region
      %24 = vsyncadd [#allocation6], 0
      %s26 = sshll.u32 %s1, 4
      %s27 = int_to_ptr.hbm [resolvable:$true] %s26
      %s28 = sshll.u32 [#allocation5], 4
      %s29 = int_to_ptr.vmem [resolvable:$true] %s28
      %31 = dma.hbm_to_vmem [thread:$0]  %s27, 32, %s29, [#allocation6]
    $region9: #{tpu_custom_call.1} parent=1 // pred_fallthru
      _
    // Predicated region
    $region10: #{tpu_custom_call.1} parent=1 // pred_check
      _
    $region11: #{tpu_custom_call.1} parent=1 // pred_check_branch
      %33 = sbr.rel (0) target = $region13
    $region12: #{tpu_custom_call.1} parent=1 // pred_region
      %35 = dma.done [#allocation3], 64
    $region13: #{tpu_custom_call.1} parent=1 // pred_fallthru
      _
    // Predicated region
    $region14: #{tpu_custom_call.1} parent=1 // pred_check
      _
    $region15: #{tpu_custom_call.1} parent=1 // pred_check_branch
      %37 = sbr.rel (0) target = $region17
    $region16: #{tpu_custom_call.1} parent=1 // pred_region
      %39 = dma.done [#allocation6], 32
    $region17: #{tpu_custom_call.1} parent=1 // pred_fallthru
      _
    %v40 = vld [vmem:[#allocation2] sm:$0xf]
    %v41 = vld [vmem:[#allocation5] sm:$0x3]
    %v43 = vperm.slane %v41, 0
    %v44 = vperm.slane %v41, 1
    %v45 = vrot.slane %v44, 6
    %vm46 = vcmask 1041408
    %v47 = vsel %vm46, %v43, %v45
    %v49 = vadd.f32 %v40, %v47
    %50 = vst [vmem:[#allocation7] sm:$0xf] %v49
    // Predicated region
    $region18: #{tpu_custom_call.1} parent=1 // pred_check
      _
    $region19: #{tpu_custom_call.1} parent=1 // pred_check_branch
      %52 = sbr.rel (0) target = $region21
    $region20: #{tpu_custom_call.1} parent=1 // pred_region
      %54 = vsyncadd [#allocation4], 0
      %s56 = sshll.u32 [#allocation7], 4
      %s57 = int_to_ptr.vmem [resolvable:$true] %s56
      %s58 = sshll.u32 %s2, 4
      %s59 = int_to_ptr.hbm [resolvable:$true] %s58
      %61 = dma.vmem_to_hbm [thread:$0]  %s57, 64, %s59, [#allocation4]
    $region21: #{tpu_custom_call.1} parent=1 // pred_fallthru
      _
    // Predicated region
    $region22: #{tpu_custom_call.1} parent=1 // pred_check
      _
    $region23: #{tpu_custom_call.1} parent=1 // pred_check_branch
      %63 = sbr.rel (0) target = $region25
    $region24: #{tpu_custom_call.1} parent=1 // pred_region
      %65 = dma.done [#allocation4], 64
    $region25: #{tpu_custom_call.1} parent=1 // pred_fallthru
      _
    %66 = vsyncpa [#allocation3], 1
    %67 = vsyncpa [#allocation6], 1
    %68 = vsyncpa [#allocation4], 1

</llo_original>
